<compile_context>
chip_gen: v5e
topology: v5e:2x2
jax: 0.10.0
libtpu: 0.0.40
codegen_flags: <defaults>
</compile_context>

<pallas_src>
import functools

import jax
import jax.numpy as jnp
from jax import lax
from jax.experimental import pallas as pl
from jax.experimental.pallas import tpu as pltpu

# Conservative tile-data budget (streamed operands double-buffered + f32 temps)
# that fits comfortably inside every generation's scoped VMEM (v5e raised to
# 32 MiB below; v6e/v7x defaults are >= 32 MiB).
_VMEM_TILE_BUDGET_BYTES = 20 * 1024 * 1024
_VMEM_LIMIT_BYTES = 32 * 1024 * 1024


def _choose_block_rows(S, H, dtype, n_streams):
    """Pick a sublane-pack-aligned row tile that fits the VMEM budget."""
    itemsize = jnp.dtype(dtype).itemsize
    pack = max(8, 32 // itemsize)  # sublane packing: 8 (f32), 16 (bf16/f16)
    if S <= pack:
        # Tiny input: a single full-extent block is legal (block == full dims).
        return S
    # Bytes per tile row: streamed S x H operands (double-buffered by the
    # Pallas pipeline) plus ~2 f32 temporaries for the normalization math.
    per_row = n_streams * 2 * H * itemsize + 2 * H * 4
    rows = _VMEM_TILE_BUDGET_BYTES // per_row
    rows = min(rows, 1024, S)
    rows = max((rows // pack) * pack, pack)
    if rows >= S:
        # Budget allowed the whole array in one block: split into >= 2 grid
        # steps anyway so the "parallel" axis can be sharded across v7x's
        # two TensorCores and the DMA pipeline has something to overlap.
        half = -(-S // 2)  # ceil(S / 2)
        rows = ((half + pack - 1) // pack) * pack
        if rows >= S:
            rows = max(((S - 1) // pack) * pack, pack)
    return rows


def _rmsnorm_res_kernel(x_ref, res_ref, w_ref, out_ref, resid_out_ref, *, eps):
    # Fused residual add, done in the input dtype (matches torch `+=`).
    h = x_ref[...] + res_ref[...]
    resid_out_ref[...] = h.astype(resid_out_ref.dtype)

    # RMS norm in float32 (matches the torch `.to(float32)` path).
    hf = h.astype(jnp.float32)
    var = jnp.mean(hf * hf, axis=-1, keepdims=True)
    normed = hf * lax.rsqrt(var + eps)

    # Cast back to the weight dtype BEFORE multiplying (matches
    # `self.weight * hidden_states.to(self.weight.dtype)`).
    w = w_ref[...]
    if w.dtype in (jnp.float16, jnp.bfloat16):
        normed = normed.astype(w.dtype)
    out_ref[...] = (w * normed).astype(out_ref.dtype)


def _rmsnorm_kernel(x_ref, w_ref, out_ref, *, eps):
    # No residual: only one S x H input stream and one S x H output stream.
    hf = x_ref[...].astype(jnp.float32)
    var = jnp.mean(hf * hf, axis=-1, keepdims=True)
    normed = hf * lax.rsqrt(var + eps)
    w = w_ref[...]
    if w.dtype in (jnp.float16, jnp.bfloat16):
        normed = normed.astype(w.dtype)
    out_ref[...] = (w * normed).astype(out_ref.dtype)


def llama_rmsnorm(hidden_states, weight, residual=None, eps=1e-6, block_rows=None):
    """Returns (normed_hidden_states, residual_out), matching the PyTorch module."""
    S, H = hidden_states.shape
    w2 = weight.reshape(1, H)

    n_streams = 4 if residual is not None else 2
    if block_rows is None:
        block_rows = _choose_block_rows(S, H, hidden_states.dtype, n_streams)
    grid = (pl.cdiv(S, block_rows),)

    row_spec = pl.BlockSpec((block_rows, H), lambda i: (i, 0))
    w_spec = pl.BlockSpec((1, H), lambda i: (0, 0))  # constant block -> stays resident
    compiler_params = pltpu.CompilerParams(
        dimension_semantics=("parallel",),
        vmem_limit_bytes=_VMEM_LIMIT_BYTES,
    )

    if residual is not None:
        kernel = functools.partial(_rmsnorm_res_kernel, eps=eps)
        out, res = pl.pallas_call(
            kernel,
            out_shape=(
                jax.ShapeDtypeStruct((S, H), hidden_states.dtype),
                jax.ShapeDtypeStruct((S, H), hidden_states.dtype),
            ),
            grid_spec=pltpu.PrefetchScalarGridSpec(
                num_scalar_prefetch=0,
                grid=grid,
                in_specs=[row_spec, row_spec, w_spec],
                out_specs=[row_spec, row_spec],
            ),
            compiler_params=compiler_params,
        )(hidden_states, residual, w2)
        return out, res

    # residual is None: residual_out == hidden_states, so do not write it back
    # to HBM at all — just return the input array.
    kernel = functools.partial(_rmsnorm_kernel, eps=eps)
    out = pl.pallas_call(
        kernel,
        out_shape=jax.ShapeDtypeStruct((S, H), hidden_states.dtype),
        grid_spec=pltpu.PrefetchScalarGridSpec(
            num_scalar_prefetch=0,
            grid=grid,
            in_specs=[row_spec, w_spec],
            out_specs=row_spec,
        ),
        compiler_params=compiler_params,
    )(hidden_states, w2)
    return out, hidden_states


def _ref_rmsnorm(x, w, residual, eps):
    h = x if residual is None else x + residual
    hf = h.astype(jnp.float32)
    var = jnp.mean(hf * hf, axis=-1, keepdims=True)
    normed = hf * lax.rsqrt(var + eps)
    if w.dtype in (jnp.float16, jnp.bfloat16):
        normed = normed.astype(w.dtype)
    return (w * normed).astype(x.dtype), h


if __name__ == "__main__":
    key = jax.random.PRNGKey(0)
    k1, k2, k3, k4, k5 = jax.random.split(key, 5)

    eps = 1e-6
    dtype = jnp.bfloat16

    # --- small shape, full-extent block path ---
    seq, hidden = 8, 32
    x = jax.random.normal(k1, (seq, hidden), dtype=jnp.float32).astype(dtype)
    resid = jax.random.normal(k2, (seq, hidden), dtype=jnp.float32).astype(dtype)
    weight = (1.0 + 0.01 * jax.random.normal(k3, (hidden,), dtype=jnp.float32)).astype(dtype)

    out, res = llama_rmsnorm(x, weight, resid, eps=eps)
    out2, res2 = llama_rmsnorm(x, weight, None, eps=eps)
    jax.block_until_ready((out, res, out2, res2))

    ref_out, ref_res = _ref_rmsnorm(x, weight, resid, eps)
    ref_out2, ref_res2 = _ref_rmsnorm(x, weight, None, eps)
    assert jnp.allclose(out.astype(jnp.float32), ref_out.astype(jnp.float32), atol=2e-2)
    assert jnp.allclose(res.astype(jnp.float32), ref_res.astype(jnp.float32), atol=2e-2)
    assert jnp.allclose(out2.astype(jnp.float32), ref_out2.astype(jnp.float32), atol=2e-2)
    assert jnp.allclose(res2.astype(jnp.float32), ref_res2.astype(jnp.float32), atol=2e-2)

    # --- slightly larger shape: exercises multi-step grid + padded tail tile ---
    seq2, hidden2 = 48, 128
    xb = jax.random.normal(k4, (seq2, hidden2), dtype=jnp.float32).astype(dtype)
    rb = jax.random.normal(k5, (seq2, hidden2), dtype=jnp.float32).astype(dtype)
    wb = (1.0 + 0.01 * jax.random.normal(k3, (hidden2,), dtype=jnp.float32)).astype(dtype)

    outb, resb = llama_rmsnorm(xb, wb, rb, eps=eps)
    outb2, resb2 = llama_rmsnorm(xb, wb, None, eps=eps)
    jax.block_until_ready((outb, resb, outb2, resb2))

    ref_outb, ref_resb = _ref_rmsnorm(xb, wb, rb, eps)
    ref_outb2, ref_resb2 = _ref_rmsnorm(xb, wb, None, eps)
    assert jnp.allclose(outb.astype(jnp.float32), ref_outb.astype(jnp.float32), atol=2e-2)
    assert jnp.allclose(resb.astype(jnp.float32), ref_resb.astype(jnp.float32), atol=2e-2)
    assert jnp.allclose(outb2.astype(jnp.float32), ref_outb2.astype(jnp.float32), atol=2e-2)
    assert jnp.allclose(resb2.astype(jnp.float32), ref_resb2.astype(jnp.float32), atol=2e-2)

    print("KERNEL_OK")
</pallas_src>

<mosaic_0001>
module attributes {stable_mosaic.version = 11 : i64} {
  func.func @_rmsnorm_res_kernel(%arg0: i32, %arg1: memref<8x32xbf16, #tpu.memory_space<vmem>>, %arg2: memref<8x32xbf16, #tpu.memory_space<vmem>>, %arg3: memref<1x32xbf16, #tpu.memory_space<vmem>>, %arg4: memref<8x32xbf16, #tpu.memory_space<vmem>>, %arg5: memref<8x32xbf16, #tpu.memory_space<vmem>>) attributes {dimension_semantics = [#tpu.dimension_semantics<parallel>], iteration_bounds = array<i64: 1>, scalar_prefetch = 0 : i64, scratch_operands = 0 : i64, tpu.core_type = #tpu.core_type<tc>, window_params = [{transform_indices = @transform_0, window_bounds = array<i64: 8, 32>}, {transform_indices = @transform_1, window_bounds = array<i64: 8, 32>}, {pipeline_mode = #tpu.pipeline_mode<synchronous>, transform_indices = @transform_2, window_bounds = array<i64: 1, 32>}, {transform_indices = @transform_3, window_bounds = array<i64: 8, 32>}, {transform_indices = @transform_4, window_bounds = array<i64: 8, 32>}]} {
    %c0 = arith.constant 0 : index
    %c0_0 = arith.constant 0 : index
    %0 = vector.load %arg1[%c0, %c0_0] : memref<8x32xbf16, #tpu.memory_space<vmem>>, vector<8x32xbf16>
    %c0_1 = arith.constant 0 : index
    %c0_2 = arith.constant 0 : index
    %1 = vector.load %arg2[%c0_1, %c0_2] : memref<8x32xbf16, #tpu.memory_space<vmem>>, vector<8x32xbf16>
    %2 = arith.addf %0, %1 : vector<8x32xbf16>
    %c0_3 = arith.constant 0 : index
    %c0_4 = arith.constant 0 : index
    %3 = vector.load %arg5[%c0_3, %c0_4] : memref<8x32xbf16, #tpu.memory_space<vmem>>, vector<8x32xbf16>
    tpu.vector_store %arg5[%c0_3, %c0_4], %2 {strides = array<i32>} : memref<8x32xbf16, #tpu.memory_space<vmem>>, vector<8x32xbf16>,
    %4 = arith.extf %2 : vector<8x32xbf16> to vector<8x32xf32>
    %5 = arith.mulf %4, %4 : vector<8x32xf32>
    %cst = arith.constant dense<0.000000e+00> : vector<8xf32>
    %6 = vector.multi_reduction <add>, %5, %cst [1] : vector<8x32xf32> to vector<8xf32>
    %7 = vector.shape_cast %6 : vector<8xf32> to vector<8x1xf32>
    %cst_5 = arith.constant 3.200000e+01 : f32
    %8 = vector.broadcast %cst_5 : f32 to vector<8x1xf32>
    %9 = arith.divf %7, %8 : vector<8x1xf32>
    %cst_6 = arith.constant 9.99999997E-7 : f32
    %10 = vector.broadcast %cst_6 : f32 to vector<8x1xf32>
    %11 = arith.addf %9, %10 : vector<8x1xf32>
    %12 = math.rsqrt %11 : vector<8x1xf32>
    %13 = vector.broadcast %12 : vector<8x1xf32> to vector<8x32xf32>
    %14 = arith.mulf %4, %13 : vector<8x32xf32>
    %c0_7 = arith.constant 0 : index
    %c0_8 = arith.constant 0 : index
    %15 = vector.load %arg3[%c0_7, %c0_8] : memref<1x32xbf16, #tpu.memory_space<vmem>>, vector<1x32xbf16>
    %16 = arith.truncf %14 : vector<8x32xf32> to vector<8x32xbf16>
    %17 = vector.broadcast %15 : vector<1x32xbf16> to vector<8x32xbf16>
    %18 = arith.mulf %17, %16 : vector<8x32xbf16>
    %c0_9 = arith.constant 0 : index
    %c0_10 = arith.constant 0 : index
    %19 = vector.load %arg4[%c0_9, %c0_10] : memref<8x32xbf16, #tpu.memory_space<vmem>>, vector<8x32xbf16>
    tpu.vector_store %arg4[%c0_9, %c0_10], %18 {strides = array<i32>} : memref<8x32xbf16, #tpu.memory_space<vmem>>, vector<8x32xbf16>,
    return
  }
  func.func @transform_0(%arg0: i32) -> (i32, i32) {
    %c0_i32 = arith.constant 0 : i32
    %c0_i32_0 = arith.constant 0 : i32
    return %arg0, %c0_i32 : i32, i32
  }
  func.func @transform_1(%arg0: i32) -> (i32, i32) {
    %c0_i32 = arith.constant 0 : i32
    %c0_i32_0 = arith.constant 0 : i32
    return %arg0, %c0_i32 : i32, i32
  }
  func.func @transform_2(%arg0: i32) -> (i32, i32) {
    %c0_i32 = arith.constant 0 : i32
    %c0_i32_0 = arith.constant 0 : i32
    %c0_i32_1 = arith.constant 0 : i32
    return %c0_i32, %c0_i32_0 : i32, i32
  }
  func.func @transform_3(%arg0: i32) -> (i32, i32) {
    %c0_i32 = arith.constant 0 : i32
    %c0_i32_0 = arith.constant 0 : i32
    return %arg0, %c0_i32 : i32, i32
  }
  func.func @transform_4(%arg0: i32) -> (i32, i32) {
    %c0_i32 = arith.constant 0 : i32
    %c0_i32_0 = arith.constant 0 : i32
    return %arg0, %c0_i32 : i32, i32
  }
}

</mosaic_0001>

<llo_original>
// kernel: tpu_custom_call.1
$region0: #{tpu_custom_call.1}
  #allocation0 [shape = 'u32[]', space=smem, size = 0x4, offset = 0x4, fixed_abs, tag = 'smem constant byte address 0x4 - core index']
  #allocation1 [shape = 'u32[72,128]{1,0:T(1,128)}', space=vmem, size = 0x9000, scoped, tag = 'internal scratch']
  %s0 = inlined_call_operand.hbm [shape: bf16[8,32], index: 0, kind: input, shape index: {}]
  %s1 = inlined_call_operand.hbm [shape: bf16[8,32], index: 1, kind: input, shape index: {}]
  %s2 = inlined_call_operand.vmem [shape: bf16[1,32], index: 2, kind: input, shape index: {}]
  %s3 = inlined_call_operand.hbm [shape: bf16[8,32], index: 3, kind: output, shape index: {0}]
  %s4 = inlined_call_operand.hbm [shape: bf16[8,32], index: 4, kind: output, shape index: {1}]
  %5 = xla_tuple %s3, %s4
  %s6 = sld [smem:[#allocation0]]
  $region38: #{tpu_custom_call.1} parent=0
    _
  %s8 = ssub.s32 1, %s6
  %s9 = scalar_select 0, %s8, %s6
  $region1: #{tpu_custom_call.1} parent=0
    #allocation2 [shape = 'u8[2048]{0}', space=vmem, size = 0x800, scoped, tag = 'input window, operand 0, single buffered']
    #allocation3 [shape = 's32[1]{0}', space=sflag, size = 0x4, scoped, tag = 'scoped memory for tpu_custom_call.1']
    #allocation4 [shape = 's32[1]{0}', space=sflag, size = 0x4, scoped, tag = 'scoped memory for tpu_custom_call.1']
    #allocation5 [shape = 'u8[2048]{0}', space=vmem, size = 0x800, scoped, tag = 'input window, operand 1, single buffered']
    #allocation6 [shape = 's32[1]{0}', space=sflag, size = 0x4, scoped, tag = 'scoped memory for tpu_custom_call.1']
    #allocation7 [shape = 'u8[2048]{0}', space=vmem, size = 0x800, scoped, tag = 'output window, operand 0, single buffered']
    #allocation8 [shape = 'u8[2048]{0}', space=vmem, size = 0x800, scoped, tag = 'output window, operand 1, single buffered']
    #allocation9 [shape = 's32[1]{0}', space=sflag, size = 0x4, scoped, tag = 'scoped memory for tpu_custom_call.1']
    %10 = vsyncpa [#allocation3], 0
    %11 = vsyncpa [#allocation6], 0
    %12 = vsyncpa [#allocation4], 0
    %13 = vsyncpa [#allocation9], 0
    // Predicated region
    $region2: #{tpu_custom_call.1} parent=1 // pred_check
      _
    $region3: #{tpu_custom_call.1} parent=1 // pred_check_branch
      %15 = sbr.rel (0) target = $region5
    $region4: #{tpu_custom_call.1} parent=1 // pred_region
      %17 = vsyncadd [#allocation3], 0
      %s19 = sshll.u32 %s0, 4
      %s20 = int_to_ptr.hbm [resolvable:$true] %s19
      %s21 = sshll.u32 [#allocation2], 4
      %s22 = int_to_ptr.vmem [resolvable:$true] %s21
      %24 = dma.hbm_to_vmem [thread:$0]  %s20, 64, %s22, [#allocation3]
    $region5: #{tpu_custom_call.1} parent=1 // pred_fallthru
      _
    // Predicated region
    $region6: #{tpu_custom_call.1} parent=1 // pred_check
      _
    $region7: #{tpu_custom_call.1} parent=1 // pred_check_branch
      %26 = sbr.rel (0) target = $region9
    $region8: #{tpu_custom_call.1} parent=1 // pred_region
      %28 = vsyncadd [#allocation6], 0
      %s30 = sshll.u32 %s1, 4
      %s31 = int_to_ptr.hbm [resolvable:$true] %s30
      %s32 = sshll.u32 [#allocation5], 4
      %s33 = int_to_ptr.vmem [resolvable:$true] %s32
      %35 = dma.hbm_to_vmem [thread:$0]  %s31, 64, %s33, [#allocation6]
    $region9: #{tpu_custom_call.1} parent=1 // pred_fallthru
      _
    // Predicated region
    $region10: #{tpu_custom_call.1} parent=1 // pred_check
      _
    $region11: #{tpu_custom_call.1} parent=1 // pred_check_branch
      %37 = sbr.rel (0) target = $region13
    $region12: #{tpu_custom_call.1} parent=1 // pred_region
      _
    $region13: #{tpu_custom_call.1} parent=1 // pred_fallthru
      _
    // Predicated region
    $region14: #{tpu_custom_call.1} parent=1 // pred_check
      _
    $region15: #{tpu_custom_call.1} parent=1 // pred_check_branch
      %39 = sbr.rel (0) target = $region17
    $region16: #{tpu_custom_call.1} parent=1 // pred_region
      %41 = dma.done [#allocation3], 64
    $region17: #{tpu_custom_call.1} parent=1 // pred_fallthru
      _
    // Predicated region
    $region18: #{tpu_custom_call.1} parent=1 // pred_check
      _
    $region19: #{tpu_custom_call.1} parent=1 // pred_check_branch
      %43 = sbr.rel (0) target = $region21
    $region20: #{tpu_custom_call.1} parent=1 // pred_region
      %45 = dma.done [#allocation6], 64
    $region21: #{tpu_custom_call.1} parent=1 // pred_fallthru
      _
    %v46 = vld [vmem:[#allocation2] sm:$0xf]
    %v47 = vld [vmem:[#allocation5] sm:$0xf]
    %v48 = vunpack.c.l.bf16 %v46
    %v49 = vunpack.c.l.bf16 %v47
    %v50 = vadd.f32 %v48, %v49
    %v51 = vpack.c.bf16 %v50, %v50
    %vm52 = vcmask 257024
    %53 = vst.msk [vmem:[#allocation8] sm:$0xf] %vm52, %v51
    %v54 = vunpack.c.l.bf16 %v51
    %v55 = vmul.f32 %v54, %v54
    %vm56 = vcmask 261120
    %v57 = vsel %vm56, %v55, 0.0
    %58 = vadd.xlane.f32.xlu0 %v57
    %v59 = vpop.xlane.xlu0 %58
    %v60 = vrcp.pop 32.0
    %v61 = vmul.f32 32.0, %v60
    %v62 = vsub.f32 1.0, %v61
    %v63 = vmul.f32 %v60, %v62
    %v64 = vadd.f32 %v60, %v63
    %vm65 = vweird.f32 %v60
    %v66 = vsel %vm65, %v60, %v64
    %v67 = vmul.f32 %v59, %v66
    %v68 = vadd.f32 %v67, 1e-06
    %v69 = vrsqrt.pop %v68
    %v70 = vmul.f32 %v69, %v68
    %v71 = vmul.f32 %v70, %v69
    %v72 = vmul.f32 0.5, %v71
    %v73 = vsub.f32 1.5, %v72
    %v74 = vmul.f32 %v69, %v73
    %vm75 = vweird.f32 %v68
    %vm76 = vweird.f32 %v69
    %vm77 = vmor %vm75, %vm76
    %v78 = vsel %vm77, %v69, %v74
    %v79 = vmul.f32 %v54, %v78
    %v80 = vld [vmem:[%s2] sm:$0x1]
    %v81 = vpack.c.bf16 %v79, %v79
    %v83 = vpack.i.b16 %v80, %v80
    %v85 = vperm.slane %v83, 0
    %v86 = vunpack.c.l.bf16 %v85
    %v87 = vunpack.c.l.bf16 %v81
    %v88 = vmul.f32 %v86, %v87
    %v89 = vpack.c.bf16 %v88, %v88
    %90 = vst.msk [vmem:[#allocation7] sm:$0xf] %vm52, %v89
    // Predicated region
    $region22: #{tpu_custom_call.1} parent=1 // pred_check
      _
    $region23: #{tpu_custom_call.1} parent=1 // pred_check_branch
      %92 = sbr.rel (0) target = $region25
    $region24: #{tpu_custom_call.1} parent=1 // pred_region
      %94 = vsyncadd [#allocation4], 0
      %s96 = sshll.u32 [#allocation7], 4
      %s97 = int_to_ptr.vmem [resolvable:$true] %s96
      %s98 = sshll.u32 %s3, 4
      %s99 = int_to_ptr.hbm [resolvable:$true] %s98
      %101 = dma.vmem_to_hbm [thread:$0]  %s97, 64, %s99, [#allocation4]
    $region25: #{tpu_custom_call.1} parent=1 // pred_fallthru
      _
    // Predicated region
    $region26: #{tpu_custom_call.1} parent=1 // pred_check
      _
    $region27: #{tpu_custom_call.1} parent=1 // pred_check_branch
      %103 = sbr.rel (0) target = $region29
    $region28: #{tpu_custom_call.1} parent=1 // pred_region
      %105 = vsyncadd [#allocation9], 0
      %s107 = sshll.u32 [#allocation8], 4
      %s108 = int_to_ptr.vmem [resolvable:$true] %s107
      %s109 = sshll.u32 %s4, 4
      %s110 = int_to_ptr.hbm [resolvable:$true] %s109
      %112 = dma.vmem_to_hbm [thread:$0]  %s108, 64, %s110, [#allocation9]
    $region29: #{tpu_custom_call.1} parent=1 // pred_fallthru
      _
    // Predicated region
    $region30: #{tpu_custom_call.1} parent=1 // pred_check
      _
    $region31: #{tpu_custom_call.1} parent=1 // pred_check_branch
      %114 = sbr.rel (0) target = $region33
    $region32: #{tpu_custom_call.1} parent=1 // pred_region
      %116 = dma.done [#allocation4], 64
    $region33: #{tpu_custom_call.1} parent=1 // pred_fallthru
      _
    // Predicated region
    $region34: #{tpu_custom_call.1} parent=1 // pred_check
      _
    $region35: #{tpu_custom_call.1} parent=1 // pred_check_branch
      %118 = sbr.rel (0) target = $region37
    $region36: #{tpu_custom_call.1} parent=1 // pred_region
      %120 = dma.done [#allocation9], 64
    $region37: #{tpu_custom_call.1} parent=1 // pred_fallthru
      _
    %121 = vsyncpa [#allocation3], 1
    %122 = vsyncpa [#allocation6], 1
    %123 = vsyncpa [#allocation4], 1
    %124 = vsyncpa [#allocation9], 1

</llo_original>
